<compile_context>
chip_gen: v6e
topology: v6e:2x2x1
jax: 0.10.0
libtpu: 0.0.40
codegen_flags: <defaults>
</compile_context>

<pallas_src>
import jax
import jax.numpy as jnp
import numpy as np
from jax.experimental import pallas as pl
from jax.experimental.pallas import tpu as pltpu

TAU = 2.0          # LIFNode(tau=2): charge v <- v + (x - v)/tau == 0.5*(v + x)
V_TH = 1.0
BN_EPS = 1e-5


def ms_mlp_kernel(x_ref, w1_ref, c1_ref, w2_ref, c2_ref, o_ref, v1_ref, v2_ref):
    """One (batch b, lane-tile p, timestep t) grid step.

    x_ref, o_ref : (C, LT) f32    -- the T and B block dims are squeezed away
    w1_ref       : (hidden, C) bf16 (BN1 scale pre-folded); c1_ref: (hidden, 1) f32
    w2_ref       : (C, hidden) bf16 (BN2 scale pre-folded); c2_ref: (C, 1) f32
    v1_ref, v2_ref : VMEM scratch membrane potentials; persist across the
                     innermost ('arbitrary') time axis of the grid.
    """
    t = pl.program_id(2)

    @pl.when(t == 0)
    def _():
        v1_ref[...] = jnp.zeros_like(v1_ref)
        v2_ref[...] = jnp.zeros_like(v2_ref)

    # ---- fc1_lif: charge (tau=2 -> 0.5*(v+x)), fire, hard reset to 0 ----
    v1 = 0.5 * (v1_ref[...] + x_ref[...])
    fire1 = v1 >= V_TH
    s1 = fire1.astype(jnp.bfloat16)                      # spikes are exactly {0, 1}
    v1_ref[...] = jnp.where(fire1, 0.0, v1)

    # ---- fc1_conv (1x1, BN1 scale folded into W) + BN1 shift ----
    h = jnp.dot(w1_ref[...], s1, preferred_element_type=jnp.float32) + c1_ref[...]

    # ---- fc2_lif ----
    v2 = 0.5 * (v2_ref[...] + h)
    fire2 = v2 >= V_TH
    s2 = fire2.astype(jnp.bfloat16)
    v2_ref[...] = jnp.where(fire2, 0.0, v2)

    # ---- fc2_conv (1x1, BN2 scale folded into W) + BN2 shift ----
    o_ref[...] = jnp.dot(w2_ref[...], s2, preferred_element_type=jnp.float32) + c2_ref[...]


def _choose_lane_tile(n_lanes, batch):
    """Lane-tile width over the spatial axis N = H*W.

    Multiple of 128 dividing N, capped at 512 lanes (measured HBM roofline
    flattens there), preferring a tile that yields >= 4 (and even) total
    parallel tiles B * (N // LT) so both v7x TensorCores get >= 2 blocks.
    """
    if n_lanes % 128 != 0:
        return n_lanes                       # full-extent block is always legal
    cands = [t for t in range(128, min(n_lanes, 512) + 1, 128) if n_lanes % t == 0]

    def ok(t):
        nt = batch * (n_lanes // t)
        return nt >= 4 and nt % 2 == 0

    good = [t for t in cands if ok(t)]
    return max(good) if good else max(cands)


def ms_mlp_forward(x, w1s, c1, w2s, c2):
    """x: (T, B, C, H, W) f32 -> (T, B, C, H, W) f32 (eval-mode MS_MLP).

    w1s (hidden, C) / w2s (C, hidden) already carry the eval-mode BN scale
    gamma/sqrt(var+eps); c1 (hidden, 1) / c2 (C, 1) are the per-channel shifts.
    """
    T, B, C, H, W = x.shape
    N = H * W
    hidden = w1s.shape[0]

    # bf16 matmul operands (spikes are exactly {0,1}; weights see one rounding
    # shared with the reference).
    w1f = w1s.astype(jnp.bfloat16)
    w2f = w2s.astype(jnp.bfloat16)

    xr = x.reshape(T, B, C, N)               # fold H,W only: a free view, no copy

    lt = _choose_lane_tile(N, B)
    nt = N // lt

    out = pl.pallas_call(
        ms_mlp_kernel,
        out_shape=jax.ShapeDtypeStruct((T, B, C, N), jnp.float32),
        grid=(B, nt, T),
        in_specs=[
            pl.BlockSpec((None, None, C, lt), lambda b, p, t: (t, b, 0, p)),   # x
            pl.BlockSpec((hidden, C), lambda b, p, t: (0, 0)),                 # W1 (BN-scaled)
            pl.BlockSpec((hidden, 1), lambda b, p, t: (0, 0)),                 # BN1 shift
            pl.BlockSpec((C, hidden), lambda b, p, t: (0, 0)),                 # W2 (BN-scaled)
            pl.BlockSpec((C, 1), lambda b, p, t: (0, 0)),                      # BN2 shift
        ],
        out_specs=pl.BlockSpec((None, None, C, lt), lambda b, p, t: (t, b, 0, p)),
        scratch_shapes=[
            pltpu.VMEM((C, lt), jnp.float32),        # fc1_lif membrane potential
            pltpu.VMEM((hidden, lt), jnp.float32),   # fc2_lif membrane potential
        ],
        compiler_params=pltpu.CompilerParams(
            dimension_semantics=("parallel", "parallel", "arbitrary")),
    )(xr, w1f, c1, w2f, c2)

    return out.reshape(T, B, C, H, W)


def ms_mlp_reference(x, w1s, c1, w2s, c2):
    """Plain-JAX reference with identical math (sanity check)."""
    T, B, C, H, W = x.shape
    N = H * W
    xr = x.reshape(T, B, C, N)
    w1f = w1s.astype(jnp.bfloat16).astype(jnp.float32)
    w2f = w2s.astype(jnp.bfloat16).astype(jnp.float32)

    def lif(seq):
        def step(v, xt):
            v = 0.5 * (v + xt)
            fire = v >= V_TH
            return jnp.where(fire, 0.0, v), fire.astype(jnp.float32)
        _, spikes = jax.lax.scan(step, jnp.zeros_like(seq[0]), seq)
        return spikes

    s1 = lif(xr)
    h = jnp.einsum("hc,tbcn->tbhn", w1f, s1,
                   precision=jax.lax.Precision.HIGHEST) + c1[None, None, :, :]
    s2 = lif(h)
    y = jnp.einsum("ch,tbhn->tbcn", w2f, s2,
                   precision=jax.lax.Precision.HIGHEST) + c2[None, None, :, :]
    return y.reshape(T, B, C, H, W)


def make_params(key, in_features, hidden_features):
    """Synthetic Conv1d(k=1) + eval-mode BatchNorm1d params, folded to the
    per-channel (scaled weight, shift) form the kernel consumes.

    Folded values are snapped to a 1/128 grid (and bounded) so every matmul /
    LIF intermediate is exactly representable in f32 regardless of
    accumulation order: the hard spiking threshold then gives a bitwise
    deterministic kernel-vs-reference comparison.
    """
    ks = jax.random.split(key, 12)

    def q(v):
        return jnp.round(v * 128.0) / 128.0

    def fold(kw, kb, kg, kbe, km, kv, cout, cin):
        w = 0.25 * jax.random.normal(kw, (cout, cin), jnp.float32)
        b = 0.1 * jax.random.normal(kb, (cout,), jnp.float32)
        gamma = 1.0 + 0.1 * jax.random.normal(kg, (cout,), jnp.float32)
        beta = 0.1 * jax.random.normal(kbe, (cout,), jnp.float32)
        mean = 0.05 * jax.random.normal(km, (cout,), jnp.float32)
        var = 1.0 + jax.nn.softplus(jax.random.normal(kv, (cout,))).astype(jnp.float32)
        a = gamma / jnp.sqrt(var + BN_EPS)                       # BN scale
        w_s = q(jnp.clip(a[:, None] * w, -1.9, 1.9))             # scale folded into W
        c = q(jnp.clip(a * b + beta - a * mean, -1.9, 1.9))[:, None]
        return w_s, c

    w1s, c1 = fold(*ks[0:6], hidden_features, in_features)
    w2s, c2 = fold(*ks[6:12], in_features, hidden_features)
    return w1s, c1, w2s, c2


if __name__ == "__main__":
    # Small shapes consistent with the forward: x is (T, B, C, H, W).
    T, B, C, H, W = 4, 2, 32, 16, 16      # N = 256 -> 4 parallel lane tiles of 128
    HIDDEN = 64

    key = jax.random.PRNGKey(0)
    kx, kp = jax.random.split(key)
    x = 1.5 * jax.random.normal(kx, (T, B, C, H, W), jnp.float32) + 0.5
    x = jnp.round(jnp.clip(x, -4.0, 4.0) * 64.0) / 64.0   # 1/64 grid: exact LIF math
    params = make_params(kp, C, HIDDEN)

    out = jax.block_until_ready(jax.jit(ms_mlp_forward)(x, *params))
    ref = jax.block_until_ready(ms_mlp_reference(x, *params))

    assert out.shape == (T, B, C, H, W)
    np.testing.assert_allclose(np.asarray(out), np.asarray(ref),
                               rtol=1e-5, atol=1e-5)

    print("KERNEL_OK")
</pallas_src>

<mosaic_0001>
module attributes {stable_mosaic.version = 11 : i64} {
  func.func @ms_mlp_kernel(%arg0: i32, %arg1: i32, %arg2: i32, %arg3: memref<1x1x32x128xf32, #tpu.memory_space<vmem>>, %arg4: memref<64x32xbf16, #tpu.memory_space<vmem>>, %arg5: memref<64x1xf32, #tpu.memory_space<vmem>>, %arg6: memref<32x64xbf16, #tpu.memory_space<vmem>>, %arg7: memref<32x1xf32, #tpu.memory_space<vmem>>, %arg8: memref<1x1x32x128xf32, #tpu.memory_space<vmem>>, %arg9: memref<32x128xf32, #tpu.memory_space<vmem>>, %arg10: memref<64x128xf32, #tpu.memory_space<vmem>>) attributes {dimension_semantics = [#tpu.dimension_semantics<parallel>, #tpu.dimension_semantics<parallel>, #tpu.dimension_semantics<arbitrary>], iteration_bounds = array<i64: 2, 2, 4>, scalar_prefetch = 0 : i64, scratch_operands = 2 : i64, tpu.core_type = #tpu.core_type<tc>, window_params = [{transform_indices = @transform_0, window_bounds = array<i64: 1, 1, 32, 128>}, {pipeline_mode = #tpu.pipeline_mode<synchronous>, transform_indices = @transform_1, window_bounds = array<i64: 64, 32>}, {pipeline_mode = #tpu.pipeline_mode<synchronous>, transform_indices = @transform_2, window_bounds = array<i64: 64, 1>}, {pipeline_mode = #tpu.pipeline_mode<synchronous>, transform_indices = @transform_3, window_bounds = array<i64: 32, 64>}, {pipeline_mode = #tpu.pipeline_mode<synchronous>, transform_indices = @transform_4, window_bounds = array<i64: 32, 1>}, {transform_indices = @transform_5, window_bounds = array<i64: 1, 1, 32, 128>}]} {
    %c0_i32 = arith.constant 0 : i32
    %0 = arith.cmpi eq, %arg2, %c0_i32 : i32
    %1 = arith.extui %0 : i1 to i32
    %c0_i32_0 = arith.constant 0 : i32
    %2 = arith.cmpi ne, %1, %c0_i32_0 : i32
    scf.if %2 {
      %cst_31 = arith.constant 0.000000e+00 : f32
      %42 = vector.broadcast %cst_31 : f32 to vector<32x128xf32>
      %c0_32 = arith.constant 0 : index
      %c0_33 = arith.constant 0 : index
      %43 = vector.load %arg9[%c0_32, %c0_33] : memref<32x128xf32, #tpu.memory_space<vmem>>, vector<32x128xf32>
      tpu.vector_store %arg9[%c0_32, %c0_33], %42 {strides = array<i32>} : memref<32x128xf32, #tpu.memory_space<vmem>>, vector<32x128xf32>,
      %cst_34 = arith.constant 0.000000e+00 : f32
      %44 = vector.broadcast %cst_34 : f32 to vector<64x128xf32>
      %c0_35 = arith.constant 0 : index
      %c0_36 = arith.constant 0 : index
      %45 = vector.load %arg10[%c0_35, %c0_36] : memref<64x128xf32, #tpu.memory_space<vmem>>, vector<64x128xf32>
      tpu.vector_store %arg10[%c0_35, %c0_36], %44 {strides = array<i32>} : memref<64x128xf32, #tpu.memory_space<vmem>>, vector<64x128xf32>,
    } else {
    }
    %c0 = arith.constant 0 : index
    %c0_1 = arith.constant 0 : index
    %3 = vector.load %arg9[%c0, %c0_1] : memref<32x128xf32, #tpu.memory_space<vmem>>, vector<32x128xf32>
    %c0_2 = arith.constant 0 : index
    %c0_3 = arith.constant 0 : index
    %c0_4 = arith.constant 0 : index
    %c0_5 = arith.constant 0 : index
    %4 = vector.load %arg3[%c0_2, %c0_3, %c0_4, %c0_5] : memref<1x1x32x128xf32, #tpu.memory_space<vmem>>, vector<1x1x32x128xf32>
    %5 = vector.shape_cast %4 : vector<1x1x32x128xf32> to vector<32x128xf32>
    %6 = arith.addf %3, %5 : vector<32x128xf32>
    %cst = arith.constant 5.000000e-01 : f32
    %7 = vector.broadcast %cst : f32 to vector<32x128xf32>
    %8 = arith.mulf %7, %6 : vector<32x128xf32>
    %cst_6 = arith.constant 1.000000e+00 : f32
    %9 = vector.broadcast %cst_6 : f32 to vector<32x128xf32>
    %10 = arith.cmpf oge, %8, %9 : vector<32x128xf32>
    %11 = arith.extui %10 : vector<32x128xi1> to vector<32x128xi32>
    %12 = arith.sitofp %11 : vector<32x128xi32> to vector<32x128xf32>
    %13 = arith.truncf %12 : vector<32x128xf32> to vector<32x128xbf16>
    %cst_7 = arith.constant 0.000000e+00 : f32
    %14 = vector.broadcast %cst_7 : f32 to vector<32x128xf32>
    %15 = arith.select %10, %14, %8 : vector<32x128xi1>, vector<32x128xf32>
    %c0_8 = arith.constant 0 : index
    %c0_9 = arith.constant 0 : index
    %16 = vector.load %arg9[%c0_8, %c0_9] : memref<32x128xf32, #tpu.memory_space<vmem>>, vector<32x128xf32>
    tpu.vector_store %arg9[%c0_8, %c0_9], %15 {strides = array<i32>} : memref<32x128xf32, #tpu.memory_space<vmem>>, vector<32x128xf32>,
    %c0_10 = arith.constant 0 : index
    %c0_11 = arith.constant 0 : index
    %17 = vector.load %arg4[%c0_10, %c0_11] : memref<64x32xbf16, #tpu.memory_space<vmem>>, vector<64x32xbf16>
    %cst_12 = arith.constant dense<0.000000e+00> : vector<64x128xf32>
    %18 = tpu.matmul %17, %13, %cst_12 {dimension_numbers = #tpu.dot_dimension_numbers<[1], [0], [0], [1], [0, 0, 1, 1], [], []>} : vector<64x32xbf16>, vector<32x128xbf16>, vector<64x128xf32> -> vector<64x128xf32>
    %c0_13 = arith.constant 0 : index
    %c0_14 = arith.constant 0 : index
    %19 = vector.load %arg5[%c0_13, %c0_14] : memref<64x1xf32, #tpu.memory_space<vmem>>, vector<64x1xf32>
    %20 = vector.broadcast %19 : vector<64x1xf32> to vector<64x128xf32>
    %21 = arith.addf %18, %20 : vector<64x128xf32>
    %c0_15 = arith.constant 0 : index
    %c0_16 = arith.constant 0 : index
    %22 = vector.load %arg10[%c0_15, %c0_16] : memref<64x128xf32, #tpu.memory_space<vmem>>, vector<64x128xf32>
    %23 = arith.addf %22, %21 : vector<64x128xf32>
    %cst_17 = arith.constant 5.000000e-01 : f32
    %24 = vector.broadcast %cst_17 : f32 to vector<64x128xf32>
    %25 = arith.mulf %24, %23 : vector<64x128xf32>
    %cst_18 = arith.constant 1.000000e+00 : f32
    %26 = vector.broadcast %cst_18 : f32 to vector<64x128xf32>
    %27 = arith.cmpf oge, %25, %26 : vector<64x128xf32>
    %28 = arith.extui %27 : vector<64x128xi1> to vector<64x128xi32>
    %29 = arith.sitofp %28 : vector<64x128xi32> to vector<64x128xf32>
    %30 = arith.truncf %29 : vector<64x128xf32> to vector<64x128xbf16>
    %cst_19 = arith.constant 0.000000e+00 : f32
    %31 = vector.broadcast %cst_19 : f32 to vector<64x128xf32>
    %32 = arith.select %27, %31, %25 : vector<64x128xi1>, vector<64x128xf32>
    %c0_20 = arith.constant 0 : index
    %c0_21 = arith.constant 0 : index
    %33 = vector.load %arg10[%c0_20, %c0_21] : memref<64x128xf32, #tpu.memory_space<vmem>>, vector<64x128xf32>
    tpu.vector_store %arg10[%c0_20, %c0_21], %32 {strides = array<i32>} : memref<64x128xf32, #tpu.memory_space<vmem>>, vector<64x128xf32>,
    %c0_22 = arith.constant 0 : index
    %c0_23 = arith.constant 0 : index
    %34 = vector.load %arg6[%c0_22, %c0_23] : memref<32x64xbf16, #tpu.memory_space<vmem>>, vector<32x64xbf16>
    %cst_24 = arith.constant dense<0.000000e+00> : vector<32x128xf32>
    %35 = tpu.matmul %34, %30, %cst_24 {dimension_numbers = #tpu.dot_dimension_numbers<[1], [0], [0], [1], [0, 0, 1, 1], [], []>} : vector<32x64xbf16>, vector<64x128xbf16>, vector<32x128xf32> -> vector<32x128xf32>
    %c0_25 = arith.constant 0 : index
    %c0_26 = arith.constant 0 : index
    %36 = vector.load %arg7[%c0_25, %c0_26] : memref<32x1xf32, #tpu.memory_space<vmem>>, vector<32x1xf32>
    %37 = vector.broadcast %36 : vector<32x1xf32> to vector<32x128xf32>
    %38 = arith.addf %35, %37 : vector<32x128xf32>
    %c0_27 = arith.constant 0 : index
    %c0_28 = arith.constant 0 : index
    %c0_29 = arith.constant 0 : index
    %c0_30 = arith.constant 0 : index
    %39 = vector.load %arg8[%c0_27, %c0_28, %c0_29, %c0_30] : memref<1x1x32x128xf32, #tpu.memory_space<vmem>>, vector<1x1x32x128xf32>
    %40 = vector.shape_cast %39 : vector<1x1x32x128xf32> to vector<32x128xf32>
    %41 = vector.shape_cast %38 : vector<32x128xf32> to vector<1x1x32x128xf32>
    tpu.vector_store %arg8[%c0_27, %c0_28, %c0_29, %c0_30], %41 {strides = array<i32>} : memref<1x1x32x128xf32, #tpu.memory_space<vmem>>, vector<1x1x32x128xf32>,
    return
  }
  func.func @transform_0(%arg0: i32, %arg1: i32, %arg2: i32) -> (i32, i32, i32, i32) {
    %c0_i32 = arith.constant 0 : i32
    %c0_i32_0 = arith.constant 0 : i32
    return %arg2, %arg0, %c0_i32, %arg1 : i32, i32, i32, i32
  }
  func.func @transform_1(%arg0: i32, %arg1: i32, %arg2: i32) -> (i32, i32) {
    %c0_i32 = arith.constant 0 : i32
    %c0_i32_0 = arith.constant 0 : i32
    %c0_i32_1 = arith.constant 0 : i32
    return %c0_i32, %c0_i32_0 : i32, i32
  }
  func.func @transform_2(%arg0: i32, %arg1: i32, %arg2: i32) -> (i32, i32) {
    %c0_i32 = arith.constant 0 : i32
    %c0_i32_0 = arith.constant 0 : i32
    %c0_i32_1 = arith.constant 0 : i32
    return %c0_i32, %c0_i32_0 : i32, i32
  }
  func.func @transform_3(%arg0: i32, %arg1: i32, %arg2: i32) -> (i32, i32) {
    %c0_i32 = arith.constant 0 : i32
    %c0_i32_0 = arith.constant 0 : i32
    %c0_i32_1 = arith.constant 0 : i32
    return %c0_i32, %c0_i32_0 : i32, i32
  }
  func.func @transform_4(%arg0: i32, %arg1: i32, %arg2: i32) -> (i32, i32) {
    %c0_i32 = arith.constant 0 : i32
    %c0_i32_0 = arith.constant 0 : i32
    %c0_i32_1 = arith.constant 0 : i32
    return %c0_i32, %c0_i32_0 : i32, i32
  }
  func.func @transform_5(%arg0: i32, %arg1: i32, %arg2: i32) -> (i32, i32, i32, i32) {
    %c0_i32 = arith.constant 0 : i32
    %c0_i32_0 = arith.constant 0 : i32
    return %arg2, %arg0, %c0_i32, %arg1 : i32, i32, i32, i32
  }
}

</mosaic_0001>

<llo_original>
// kernel: ms_mlp_forward.1
$region0: #{ms_mlp_forward.1}
  #allocation0 [shape = 'u32[]', space=smem, size = 0x4, offset = 0x4, fixed_abs, tag = 'smem constant byte address 0x4 - core index']
  #allocation1 [shape = 'u32[144,128]{1,0:T(1,128)}', space=vmem, size = 0x12000, scoped, tag = 'internal scratch']
  #allocation2 [shape = 'f32[32,128]{1,0:T(8,128)}', space=vmem, size = 0x4000, scoped, tag = 'scratch operand']
  #allocation3 [shape = 'f32[64,128]{1,0:T(8,128)}', space=vmem, size = 0x8000, scoped, tag = 'scratch operand']
  %s0 = inlined_call_operand.vmem [shape: f32[4,2,32,256], index: 0, kind: input, shape index: {}]
  %s1 = inlined_call_operand.vmem [shape: bf16[64,32], index: 1, kind: input, shape index: {}]
  %s2 = inlined_call_operand.vmem [shape: f32[64,1], index: 2, kind: input, shape index: {}]
  %s3 = inlined_call_operand.vmem [shape: bf16[32,64], index: 3, kind: input, shape index: {}]
  %s4 = inlined_call_operand.vmem [shape: f32[32,1], index: 4, kind: input, shape index: {}]
  %s5 = inlined_call_operand.vmem [shape: f32[4,2,32,256], index: 5, kind: output, shape index: {}]
  %s6 = sld [smem:[#allocation0]]
  $region129: #{ms_mlp_forward.1} parent=0
    _
  %s8 = ssub.s32 1, %s6
  %s9 = scalar_select 0, %s8, %s6
  $region1: #{ms_mlp_forward.1} parent=0
    #allocation4 [shape = 'u8[32768]{0}', space=vmem, size = 0x8000, scoped, tag = 'input window, operand 0']
    #allocation5 [shape = 'u8[32768]{0}', space=vmem, size = 0x8000, scoped, tag = 'output window, operand 0']
    loop: start=0, step=1, limit=18
    $region2: #{ms_mlp_forward.1} parent=1 // loop_pre_header
      _
    $region3: #{ms_mlp_forward.1} parent=1 // loop_header
      %s11 = sphi 0, %s15
      %p12 = scmp.ge.s32.totalorder %s11, 18
      %s18 = sphi 0, %s37
      %s19 = sphi 0, %s33
      %s20 = sphi 0, %s29
      %s21 = sphi 0, %s18
      %s22 = sphi 0, %s19
      %s23 = sphi 0, %s20
      %s24 = sphi 0, %s21
      %s25 = sphi 0, %s22
      %s26 = sphi 0, %s23
      %s44 = sphi 0, %s46
      %s47 = sphi 0, %s44
      %s48 = sphi 0, %s47
      %s64 = sphi 0, %s48
      %s68 = sphi 0, %s68
      %s70 = sphi 0, %s68
      %s71 = sphi 0, %s70
      %s85 = sphi 0, %s71
      %s89 = sphi 0, %s89
      %s91 = sphi 0, %s89
      %s92 = sphi 0, %s91
      %s106 = sphi 0, %s92
      %s110 = sphi 0, %s110
      %s112 = sphi 0, %s110
      %s113 = sphi 0, %s112
      %s127 = sphi 0, %s113
      %s131 = sphi 0, %s131
      %s133 = sphi 0, %s131
      %s134 = sphi 0, %s133
      %s148 = sphi 0, %s134
      %s158 = sphi 0, %s160
      %s161 = sphi 0, %s158
      %s162 = sphi 0, %s161
      %s178 = sphi 0, %s162
    $region4: #{ms_mlp_forward.1} parent=1 // loop_header_branch
      %14 = sbr.rel (%p12) target = $region8
    $region5: #{ms_mlp_forward.1} parent=1 // loop_body
      %s16 = ssub.s32 %s11, 1
      %s17 = ssub.s32 %s11, 2
      %s27 = sadd.s32 1, %s20
      %p28 = scmp.ge.s32.totalorder %s27, 4
      %s29 = scalar_select %p28, 0, %s27
      %s30 = sadd.s32 1, %s19
      %s31 = scalar_select %p28, %s30, %s19
      %p32 = scmp.ge.s32.totalorder %s31, 2
      %s33 = scalar_select %p32, 0, %s31
      %s34 = sadd.s32 1, %s18
      %s35 = scalar_select %p32, %s34, %s18
      %p36 = scmp.ge.s32.totalorder %s35, 2
      %s37 = scalar_select %p36, 0, %s35
      %s38 = ssub.s32 %s20, %s29
      %s39 = ssub.s32 %s18, %s37
      %s40 = sor.u32 %s38, %s39
      %s41 = ssub.s32 %s19, %s33
      %s42 = sor.u32 %s40, %s41
      %p43 = scmp.eq.s32.totalorder %s42, 0
      %s45 = sadd.s32 %s44, 1
      %s46 = scalar_select %p43, %s44, %s45
      %p49 = pneg %p43
      %p50 = scmp.eq.s32.totalorder %s11, 15
      %p51 = por %p49, %p50
      %p52 = scmp.ne.s32.totalorder %s44, %s47
      %p53 = scmp.eq.s32.totalorder %s11, 0
      %p54 = por %p52, %p53
      %p55 = scmp.ne.s32.totalorder %s44, %s47
      %p56 = scmp.eq.s32.totalorder %s16, 15
      %p57 = por %p55, %p56
      %p58 = scmp.ne.s32.totalorder %s47, %s48
      %p59 = scmp.eq.s32.totalorder %s16, 0
      %p60 = por %p58, %p59
      %p61 = scmp.ne.s32.totalorder %s47, %s48
      %p62 = scmp.eq.s32.totalorder %s17, 15
      %p63 = por %p61, %p62
      %p65 = scmp.ne.s32.totalorder %s48, %s64
      %p66 = scmp.eq.s32.totalorder %s17, 0
      %p67 = por %p65, %p66
      %s69 = sadd.s32 %s68, 1
      %p72 = scmp.eq.s32.totalorder %s11, 15
      %p73 = scmp.ne.s32.totalorder %s68, %s70
      %p74 = scmp.eq.s32.totalorder %s11, 0
      %p75 = por %p73, %p74
      %p76 = scmp.ne.s32.totalorder %s68, %s70
      %p77 = scmp.eq.s32.totalorder %s16, 15
      %p78 = por %p76, %p77
      %p79 = scmp.ne.s32.totalorder %s70, %s71
      %p80 = scmp.eq.s32.totalorder %s16, 0
      %p81 = por %p79, %p80
      %p82 = scmp.ne.s32.totalorder %s70, %s71
      %p83 = scmp.eq.s32.totalorder %s17, 15
      %p84 = por %p82, %p83
      %p86 = scmp.ne.s32.totalorder %s71, %s85
      %p87 = scmp.eq.s32.totalorder %s17, 0
      %p88 = por %p86, %p87
      %s90 = sadd.s32 %s89, 1
      %p93 = scmp.eq.s32.totalorder %s11, 15
      %p94 = scmp.ne.s32.totalorder %s89, %s91
      %p95 = scmp.eq.s32.totalorder %s11, 0
      %p96 = por %p94, %p95
      %p97 = scmp.ne.s32.totalorder %s89, %s91
      %p98 = scmp.eq.s32.totalorder %s16, 15
      %p99 = por %p97, %p98
      %p100 = scmp.ne.s32.totalorder %s91, %s92
      %p101 = scmp.eq.s32.totalorder %s16, 0
      %p102 = por %p100, %p101
      %p103 = scmp.ne.s32.totalorder %s91, %s92
      %p104 = scmp.eq.s32.totalorder %s17, 15
      %p105 = por %p103, %p104
      %p107 = scmp.ne.s32.totalorder %s92, %s106
      %p108 = scmp.eq.s32.totalorder %s17, 0
      %p109 = por %p107, %p108
      %s111 = sadd.s32 %s110, 1
      %p114 = scmp.eq.s32.totalorder %s11, 15
      %p115 = scmp.ne.s32.totalorder %s110, %s112
      %p116 = scmp.eq.s32.totalorder %s11, 0
      %p117 = por %p115, %p116
      %p118 = scmp.ne.s32.totalorder %s110, %s112
      %p119 = scmp.eq.s32.totalorder %s16, 15
      %p120 = por %p118, %p119
      %p121 = scmp.ne.s32.totalorder %s112, %s113
      %p122 = scmp.eq.s32.totalorder %s16, 0
      %p123 = por %p121, %p122
      %p124 = scmp.ne.s32.totalorder %s112, %s113
      %p125 = scmp.eq.s32.totalorder %s17, 15
      %p126 = por %p124, %p125
      %p128 = scmp.ne.s32.totalorder %s113, %s127
      %p129 = scmp.eq.s32.totalorder %s17, 0
      %p130 = por %p128, %p129
      %s132 = sadd.s32 %s131, 1
      %p135 = scmp.eq.s32.totalorder %s11, 15
      %p136 = scmp.ne.s32.totalorder %s131, %s133
      %p137 = scmp.eq.s32.totalorder %s11, 0
      %p138 = por %p136, %p137
      %p139 = scmp.ne.s32.totalorder %s131, %s133
      %p140 = scmp.eq.s32.totalorder %s16, 15
      %p141 = por %p139, %p140
      %p142 = scmp.ne.s32.totalorder %s133, %s134
      %p143 = scmp.eq.s32.totalorder %s16, 0
      %p144 = por %p142, %p143
      %p145 = scmp.ne.s32.totalorder %s133, %s134
      %p146 = scmp.eq.s32.totalorder %s17, 15
      %p147 = por %p145, %p146
      %p149 = scmp.ne.s32.totalorder %s134, %s148
      %p150 = scmp.eq.s32.totalorder %s17, 0
      %p151 = por %p149, %p150
      %s152 = ssub.s32 %s20, %s29
      %s153 = ssub.s32 %s18, %s37
      %s154 = sor.u32 %s152, %s153
      %s155 = ssub.s32 %s19, %s33
      %s156 = sor.u32 %s154, %s155
      %p157 = scmp.eq.s32.totalorder %s156, 0
      %s159 = sadd.s32 %s158, 1
      %s160 = scalar_select %p157, %s158, %s159
      %p163 = pneg %p157
      %p164 = scmp.eq.s32.totalorder %s11, 15
      %p165 = por %p163, %p164
      %p166 = scmp.ne.s32.totalorder %s158, %s161
      %p167 = scmp.eq.s32.totalorder %s11, 0
      %p168 = por %p166, %p167
      %p169 = scmp.ne.s32.totalorder %s158, %s161
      %p170 = scmp.eq.s32.totalorder %s16, 15
      %p171 = por %p169, %p170
      %p172 = scmp.ne.s32.totalorder %s161, %s162
      %p173 = scmp.eq.s32.totalorder %s16, 0
      %p174 = por %p172, %p173
      %p175 = scmp.ne.s32.totalorder %s161, %s162
      %p176 = scmp.eq.s32.totalorder %s17, 15
      %p177 = por %p175, %p176
      %p179 = scmp.ne.s32.totalorder %s162, %s178
      %p180 = scmp.eq.s32.totalorder %s17, 0
      %p181 = por %p179, %p180
      %p182 = scmp.le.s32.totalorder 1, %s11
      %p183 = scmp.lt.s32.totalorder %s11, 17
      %p184 = pnand %p182, %p183
      %p185 = pneg %p184
      // Predicated region
      $region9: #{ms_mlp_forward.1} parent=5 // pred_check
        _
      $region10: #{ms_mlp_forward.1} parent=5 // pred_check_branch
        %187 = sbr.rel (%p184) target = $region12
      $region11: #{ms_mlp_forward.1} parent=5 // pred_region
        %s188 = ssub.s32 %s11, 1
        // Predicated region
        $region13: #{ms_mlp_forward.1} parent=11 // pred_check
          %p189 = pneg %p81
        $region14: #{ms_mlp_forward.1} parent=11 // pred_check_branch
          %191 = sbr.rel (%p189) target = $region16
        $region15: #{ms_mlp_forward.1} parent=11 // pred_region
          _
        $region16: #{ms_mlp_forward.1} parent=11 // pred_fallthru
          _
        // Predicated region
        $region17: #{ms_mlp_forward.1} parent=11 // pred_check
          %p192 = pneg %p102
        $region18: #{ms_mlp_forward.1} parent=11 // pred_check_branch
          %194 = sbr.rel (%p192) target = $region20
        $region19: #{ms_mlp_forward.1} parent=11 // pred_region
          _
        $region20: #{ms_mlp_forward.1} parent=11 // pred_fallthru
          _
        // Predicated region
        $region21: #{ms_mlp_forward.1} parent=11 // pred_check
          %p195 = pneg %p123
        $region22: #{ms_mlp_forward.1} parent=11 // pred_check_branch
          %197 = sbr.rel (%p195) target = $region24
        $region23: #{ms_mlp_forward.1} parent=11 // pred_region
          _
        $region24: #{ms_mlp_forward.1} parent=11 // pred_fallthru
          _
        // Predicated region
        $region25: #{ms_mlp_forward.1} parent=11 // pred_check
          %p198 = pneg %p144
        $region26: #{ms_mlp_forward.1} parent=11 // pred_check_branch
          %200 = sbr.rel (%p198) target = $region28
        $region27: #{ms_mlp_forward.1} parent=11 // pred_region
          _
        $region28: #{ms_mlp_forward.1} parent=11 // pred_fallthru
          _
      $region12: #{ms_mlp_forward.1} parent=5 // pred_fallthru
        _
      %p201 = scmp.lt.s32.totalorder %s11, 16
      // Predicated region
      $region29: #{ms_mlp_forward.1} parent=5 // pred_check
        %p202 = pneg %p201
      $region30: #{ms_mlp_forward.1} parent=5 // pred_check_branch
        %204 = sbr.rel (%p202) target = $region32
      $region31: #{ms_mlp_forward.1} parent=5 // pred_region
        // Predicated region
        $region33: #{ms_mlp_forward.1} parent=31 // pred_check
          %p205 = pneg %p54
        $region34: #{ms_mlp_forward.1} parent=31 // pred_check_branch
          %207 = sbr.rel (%p205) target = $region36
        $region35: #{ms_mlp_forward.1} parent=31 // pred_region
          %s208 = sand.u32 %s44, 1
          %s209 = sand.u32 %s44, 1
          %s210 = smul.addr %s209, 32
          %s211 = scalar_lea.vmem [#allocation4], %s210
          %s212 = smul.addr %s18, 8
          %s213 = sadd.s32 %s19, %s212
          %s214 = smul.addr %s20, 16
          %s215 = sadd.s32 %s213, %s214
          %s216 = smul.addr %s215, 8
          %s217 = scalar_lea.vmem %s0, %s216
          // Predicated region
          $region37: #{ms_mlp_forward.1} parent=35 // pred_check
            _
          $region38: #{ms_mlp_forward.1} parent=35 // pred_check_branch
            %219 = sbr.rel (0) target = $region40
          $region39: #{ms_mlp_forward.1} parent=35 // pred_region
            // Predicated region
            $region41: #{ms_mlp_forward.1} parent=39 // pred_check
              _
            $region42: #{ms_mlp_forward.1} parent=39 // pred_check_branch
              %221 = sbr.rel (0) target = $region44
            $region43: #{ms_mlp_forward.1} parent=39 // pred_region
              // Predicated region
              $region56: #{ms_mlp_forward.1} parent=43 // pred_check
                _
              $region57: #{ms_mlp_forward.1} parent=43 // pred_check_branch
                %243 = sbr.rel (0) target = $region59
              $region58: #{ms_mlp_forward.1} parent=43 // pred_region
                loop: start=0, step=1, limit=1
                $region60: #{ms_mlp_forward.1} parent=58 // loop_pre_header
                  _
                $region61: #{ms_mlp_forward.1} parent=58 // loop_header
                  %s245 = sphi 0, %s249
                  %p246 = scmp.ge.s32.totalorder %s245, 1
                  %s250 = sphi %s217, %s217
                  %s251 = sphi %s211, %s211
                $region62: #{ms_mlp_forward.1} parent=58 // loop_header_branch
                  %248 = sbr.rel (%p246) target = $region66
                $region63: #{ms_mlp_forward.1} parent=58 // loop_body
                  %v252 = vld [vmem:[%s250] sm:$0xff]
                  %253 = vst [vmem:[%s251] sm:$0xff] %v252
                  %v254 = vld [vmem:[%s250 + $0x10] sm:$0xff]
                  %255 = vst [vmem:[%s251 + $0x8] sm:$0xff] %v254
                  %v256 = vld [vmem:[%s250 + $0x20] sm:$0xff]
                  %257 = vst [vmem:[%s251 + $0x10] sm:$0xff] %v256
                  %v258 = vld [vmem:[%s250 + $0x30] sm:$0xff]
                  %259 = vst [vmem:[%s251 + $0x18] sm:$0xff] %v258
                $region64: #{ms_mlp_forward.1} parent=58 // loop_footer
                  %s249 = sadd.s32 1, %s245
                $region65: #{ms_mlp_forward.1} parent=58 // loop_footer_branch
                  %244 = sbr.rel target = $region61
                $region66: #{ms_mlp_forward.1} parent=58 // loop_exit
                  _
              $region59: #{ms_mlp_forward.1} parent=43 // pred_fallthru
                _
              // Predicated region
              $region67: #{ms_mlp_forward.1} parent=43 // pred_check
                _
              $region68: #{ms_mlp_forward.1} parent=43 // pred_check_branch
                %261 = sbr.rel target = $region70
              $region69: #{ms_mlp_forward.1} parent=43 // pred_region
                _
              $region70: #{ms_mlp_forward.1} parent=43 // pred_fallthru
                _
            $region44: #{ms_mlp_forward.1} parent=39 // pred_fallthru
              _
            // Predicated region
            $region45: #{ms_mlp_forward.1} parent=39 // pred_check
              _
            $region46: #{ms_mlp_forward.1} parent=39 // pred_check_branch
              %223 = sbr.rel target = $region48
            $region47: #{ms_mlp_forward.1} parent=39 // pred_region
              %s225 = ssub.s32 256, 1
              loop: start=0, step=1, limit=1
              $region49: #{ms_mlp_forward.1} parent=47 // loop_pre_header
                _
              $region50: #{ms_mlp_forward.1} parent=47 // loop_header
                %s227 = sphi 0, %s231
                %p228 = scmp.ge.s32.totalorder %s227, 1
                %s232 = sphi %s217, %s217
                %s233 = sphi %s211, %s211
              $region51: #{ms_mlp_forward.1} parent=47 // loop_header_branch
                %230 = sbr.rel (%p228) target = $region55
              $region52: #{ms_mlp_forward.1} parent=47 // loop_body
                %v234 = vld [vmem:[%s232] sm:%s225]
                %235 = vst [vmem:[%s233] sm:%s225] %v234
                %v236 = vld [vmem:[%s232 + $0x10] sm:%s225]
                %237 = vst [vmem:[%s233 + $0x8] sm:%s225] %v236
                %v238 = vld [vmem:[%s232 + $0x20] sm:%s225]
                %239 = vst [vmem:[%s233 + $0x10] sm:%s225] %v238
                %v240 = vld [vmem:[%s232 + $0x30] sm:%s225]
                %241 = vst [vmem:[%s233 + $0x18] sm:%s225] %v240
              $region53: #{ms_mlp_forward.1} parent=47 // loop_footer
                %s231 = sadd.s32 1, %s227
              $region54: #{ms_mlp_forward.1} parent=47 // loop_footer_branch
                %226 = sbr.rel target = $region50
              $region55: #{ms_mlp_forward.1} parent=47 // loop_exit
                _
            $region48: #{ms_mlp_forward.1} parent=39 // pred_fallthru
              _
          $region40: #{ms_mlp_forward.1} parent=35 // pred_fallthru
            _
          %262 = vnop
        $region36: #{ms_mlp_forward.1} parent=31 // pred_fallthru
          _
      $region32: #{ms_mlp_forward.1} parent=5 // pred_fallthru
        _
      %p263 = scmp.le.s32.totalorder 1, %s11
      %p264 = scmp.lt.s32.totalorder %s11, 17
      %p265 = pnand %p263, %p264
      %p266 = pneg %p265
      // Predicated region
      $region71: #{ms_mlp_forward.1} parent=5 // pred_check
        _
      $region72: #{ms_mlp_forward.1} parent=5 // pred_check_branch
        %268 = sbr.rel (%p265) target = $region74
      $region73: #{ms_mlp_forward.1} parent=5 // pred_region
        %s269 = ssub.s32 %s11, 1
        %s270 = sand.u32 %s47, 1
        %s271 = sand.u32 %s47, 1
        %s272 = smul.addr %s271, 32
        %s273 = scalar_lea.vmem [#allocation4], %s272
        // Predicated region
        $region75: #{ms_mlp_forward.1} parent=73 // pred_check
          %p274 = pneg %p60
        $region76: #{ms_mlp_forward.1} parent=73 // pred_check_branch
          %276 = sbr.rel (%p274) target = $region78
        $region77: #{ms_mlp_forward.1} parent=73 // pred_region
          _
        $region78: #{ms_mlp_forward.1} parent=73 // pred_fallthru
          _
        %s277 = sand.u32 %s47, 1
        %s278 = sand.u32 %s47, 1
        %s279 = smul.addr %s278, 32
        %s280 = scalar_lea.vmem [#allocation4], %s279
        %p281 = pneg %p60
        %p282 = pneg %p57
        %p283 = pneg %p81
        %p284 = pneg %p78
        %p285 = pneg %p102
        %p286 = pneg %p99
        %p287 = pneg %p123
        %p288 = pneg %p120
        %p289 = pneg %p144
        %p290 = pneg %p141
        %p291 = pneg %p174
        %p292 = pneg %p171
        %s293 = sand.u32 %s161, 1
        %s294 = sand.u32 %s161, 1
        %s295 = smul.addr %s294, 32
        %s296 = scalar_lea.vmem [#allocation5], %s295
        %p298 = scmp.eq.s32.totalorder %s23, 0
        // Predicated region
        $region79: #{ms_mlp_forward.1} parent=73 // pred_check
          %p299 = pneg %p298
        $region80: #{ms_mlp_forward.1} parent=73 // pred_check_branch
          %301 = sbr.rel (%p299) target = $region82
        $region81: #{ms_mlp_forward.1} parent=73 // pred_region
          %302 = vst [vmem:[#allocation2] sm:$0xff] 0.0
          %303 = vst [vmem:[#allocation2 + $0x8] sm:$0xff] 0.0
          %304 = vst [vmem:[#allocation2 + $0x10] sm:$0xff] 0.0
          %305 = vst [vmem:[#allocation2 + $0x18] sm:$0xff] 0.0
          %306 = vst [vmem:[#allocation3] sm:$0xff] 0.0
          %307 = vst [vmem:[#allocation3 + $0x8] sm:$0xff] 0.0
          %308 = vst [vmem:[#allocation3 + $0x10] sm:$0xff] 0.0
          %309 = vst [vmem:[#allocation3 + $0x18] sm:$0xff] 0.0
          %310 = vst [vmem:[#allocation3 + $0x20] sm:$0xff] 0.0
          %311 = vst [vmem:[#allocation3 + $0x28] sm:$0xff] 0.0
          %312 = vst [vmem:[#allocation3 + $0x30] sm:$0xff] 0.0
          %313 = vst [vmem:[#allocation3 + $0x38] sm:$0xff] 0.0
        $region82: #{ms_mlp_forward.1} parent=73 // pred_fallthru
          _
        %v314 = vld [vmem:[#allocation2] sm:$0xff]
        %v315 = vld [vmem:[#allocation2 + $0x8] sm:$0xff]
        %v316 = vld [vmem:[#allocation2 + $0x10] sm:$0xff]
        %v317 = vld [vmem:[#allocation2 + $0x18] sm:$0xff]
        %v318 = vld [vmem:[%s273] sm:$0xff]
        %v319 = vld [vmem:[%s273 + $0x8] sm:$0xff]
        %v320 = vld [vmem:[%s273 + $0x10] sm:$0xff]
        %v321 = vld [vmem:[%s273 + $0x18] sm:$0xff]
        %v322 = vadd.f32 %v314, %v318
        %v323 = vadd.f32 %v315, %v319
        %v324 = vadd.f32 %v316, %v320
        %v325 = vadd.f32 %v317, %v321
        %v326 = vmul.f32 %v322, 0.5
        %v327 = vmul.f32 %v323, 0.5
        %v328 = vmul.f32 %v324, 0.5
        %v329 = vmul.f32 %v325, 0.5
        %vm330 = vcmp.ge.f32.partialorder %v326, 1.0
        %vm331 = vcmp.ge.f32.partialorder %v327, 1.0
        %vm332 = vcmp.ge.f32.partialorder %v328, 1.0
        %vm333 = vcmp.ge.f32.partialorder %v329, 1.0
        %v334 = vsel %vm330, 1, 0
        %v335 = vsel %vm331, 1, 0
        %v336 = vsel %vm332, 1, 0
        %v337 = vsel %vm333, 1, 0
        %v338 = vcvt.s32.f32 %v334
        %v339 = vcvt.s32.f32 %v335
        %v340 = vcvt.s32.f32 %v336
        %v341 = vcvt.s32.f32 %v337
        %v342 = vpack.c.bf16 %v339, %v338
        %v343 = vpack.c.bf16 %v341, %v340
        %v344 = vsel %vm330, 0.0, %v326
        %v345 = vsel %vm331, 0.0, %v327
        %v346 = vsel %vm332, 0.0, %v328
        %v347 = vsel %vm333, 0.0, %v329
        %348 = vst [vmem:[#allocation2] sm:$0xff] %v344
        %349 = vst [vmem:[#allocation2 + $0x8] sm:$0xff] %v345
        %350 = vst [vmem:[#allocation2 + $0x10] sm:$0xff] %v346
        %351 = vst [vmem:[#allocation2 + $0x18] sm:$0xff] %v347
        %v352 = vld [vmem:[%s1] sm:$0xf]
        %v353 = vld [vmem:[%s1 + $0x4] sm:$0xf]
        %v354 = vld [vmem:[%s1 + $0x8] sm:$0xf]
        %v355 = vld [vmem:[%s1 + $0xc] sm:$0xf]
        %v356 = vld [vmem:[%s1 + $0x10] sm:$0xf]
        %v357 = vld [vmem:[%s1 + $0x14] sm:$0xf]
        %v358 = vld [vmem:[%s1 + $0x18] sm:$0xf]
        %v359 = vld [vmem:[%s1 + $0x1c] sm:$0xf]
        %v360 = vld [vmem:[%s2] sm:$0xff]
        %v361 = vld [vmem:[%s2 + $0x8] sm:$0xff]
        %v362 = vld [vmem:[%s2 + $0x10] sm:$0xff]
        %v363 = vld [vmem:[%s2 + $0x18] sm:$0xff]
        %v364 = vld [vmem:[%s2 + $0x20] sm:$0xff]
        %v365 = vld [vmem:[%s2 + $0x28] sm:$0xff]
        %v366 = vld [vmem:[%s2 + $0x30] sm:$0xff]
        %v367 = vld [vmem:[%s2 + $0x38] sm:$0xff]
        %369 = vset.pattern.permute.xlu0 0
        %370 = vperm.xlu0 %369, %v360
        %v371 = vpop.permute.xlu0 %370
        %374 = vset.pattern.permute.xlu0 0
        %375 = vperm.xlu0 %374, %v361
        %v376 = vpop.permute.xlu0 %375
        %379 = vset.pattern.permute.xlu0 0
        %380 = vperm.xlu0 %379, %v362
        %v381 = vpop.permute.xlu0 %380
        %384 = vset.pattern.permute.xlu0 0
        %385 = vperm.xlu0 %384, %v363
        %v386 = vpop.permute.xlu0 %385
        %389 = vset.pattern.permute.xlu0 0
        %390 = vperm.xlu0 %389, %v364
        %v391 = vpop.permute.xlu0 %390
        %394 = vset.pattern.permute.xlu0 0
        %395 = vperm.xlu0 %394, %v365
        %v396 = vpop.permute.xlu0 %395
        %399 = vset.pattern.permute.xlu0 0
        %400 = vperm.xlu0 %399, %v366
        %v401 = vpop.permute.xlu0 %400
        %404 = vset.pattern.permute.xlu0 0
        %405 = vperm.xlu0 %404, %v367
        %v406 = vpop.permute.xlu0 %405
        %v416 = vunpack.c.l.b16 %v352
        %v417 = vunpack.c.l.b16 %v353
        %v418 = vunpack.c.l.b16 %v354
        %v419 = vunpack.c.l.b16 %v355
        %v420 = vunpack.c.l.b16 %v356
        %v421 = vunpack.c.l.b16 %v357
        %v422 = vunpack.c.l.b16 %v358
        %v423 = vunpack.c.l.b16 %v359
        %v424 = vpack.c.b16 %v417, %v416
        %v425 = vpack.c.b16 %v419, %v418
        %v426 = vpack.c.b16 %v421, %v420
        %v427 = vpack.c.b16 %v423, %v422
        %vm428 = vcmask 261120
        %v430 = vsel %vm428, %v424, 0
        %v433 = vsel %vm428, %v425, 0
        %v436 = vsel %vm428, %v426, 0
        %v439 = vsel %vm428, %v427, 0
        %441 = vmatprep.subr.bf16.mxu0 0
        %442 = vmatpush1.bf16.msra.mxu0 0
        %443 = vmatprep.subr.bf16.mxu0 0
        %444 = vmatpush1.bf16.msra.mxu0 0
        %445 = vmatprep.subr.bf16.mxu0 0
        %446 = vmatpush1.bf16.msra.mxu0 0
        %447 = vmatprep.subr.bf16.mxu0 0
        %448 = vmatpush1.bf16.msra.mxu0 0
        %449 = vmatprep.subr.bf16.mxu0 0
        %450 = vmatpush1.bf16.msra.mxu0 0
        %451 = vmatprep.subr.bf16.mxu0 0
        %452 = vmatpush1.bf16.msra.mxu0 0
        %453 = vmatprep.subr.bf16.mxu0 0
        %454 = vmatpush1.bf16.msra.mxu0 %v343
        %455 = vmatprep.subr.bf16.mxu0 0
        %456 = vmatpush1.bf16.msra.mxu0 %v342
        %457 = vmatprep.subr.bf16.mxu0 0
        %458 = vmatpush2.bf16.msra.mxu0 0
        %459 = vmatprep.subr.bf16.mxu0 0
        %460 = vmatpush2.bf16.msra.mxu0 0
        %461 = vmatprep.subr.bf16.mxu0 0
        %462 = vmatpush2.bf16.msra.mxu0 0
        %463 = vmatprep.subr.bf16.mxu0 0
        %464 = vmatpush2.bf16.msra.mxu0 0
        %465 = vmatprep.subr.bf16.mxu0 0
        %466 = vmatpush2.bf16.msra.mxu0 0
        %467 = vmatprep.subr.bf16.mxu0 0
        %468 = vmatpush2.bf16.msra.mxu0 0
        %469 = vmatprep.subr.bf16.mxu0 0
        %470 = vmatpush2.bf16.msra.mxu0 0
        %471 = vmatprep.subr.bf16.mxu0 0
        %472 = vmatpush2.bf16.msra.mxu0 0
        %473 = vmatprep.mubr.bf16.mxu0 0
        %474 = vmatmul.mubr.bf16.gmra.mxu0 %v430
        %v475 = vpop.f32.mrf.mxu0
        %v476 = vadd.f32 %v371, %v475
        %v477 = vpop.f32.mrf.mxu0
        %v478 = vpop.f32.mrf.mxu0
        %v479 = vadd.f32 %v376, %v478
        %v480 = vpop.f32.mrf.mxu0
        %481 = vmatprep.mubr.bf16.mxu0 0
        %482 = vmatmul.mubr.bf16.gmra.mxu0 %v433
        %v483 = vpop.f32.mrf.mxu0
        %v484 = vadd.f32 %v381, %v483
        %v485 = vpop.f32.mrf.mxu0
        %v486 = vpop.f32.mrf.mxu0
        %v487 = vadd.f32 %v386, %v486
        %v488 = vpop.f32.mrf.mxu0
        %489 = vmatprep.mubr.bf16.mxu0 0
        %490 = vmatmul.mubr.bf16.gmra.mxu0 %v436
        %v491 = vpop.f32.mrf.mxu0
        %v492 = vadd.f32 %v391, %v491
        %v493 = vpop.f32.mrf.mxu0
        %v494 = vpop.f32.mrf.mxu0
        %v495 = vadd.f32 %v396, %v494
        %v496 = vpop.f32.mrf.mxu0
        %497 = vmatprep.mubr.bf16.mxu0 0
        %498 = vmatmul.mubr.bf16.gmra.mxu0 %v439
        %v499 = vpop.f32.mrf.mxu0
        %v500 = vadd.f32 %v401, %v499
        %v501 = vpop.f32.mrf.mxu0
        %v502 = vpop.f32.mrf.mxu0
        %v503 = vadd.f32 %v406, %v502
        %v504 = vpop.f32.mrf.mxu0
        %505 = vdwg.mxu0
        %v506 = vld [vmem:[#allocation3] sm:$0xff]
        %v507 = vld [vmem:[#allocation3 + $0x8] sm:$0xff]
        %v508 = vld [vmem:[#allocation3 + $0x10] sm:$0xff]
        %v509 = vld [vmem:[#allocation3 + $0x18] sm:$0xff]
        %v510 = vld [vmem:[#allocation3 + $0x20] sm:$0xff]
        %v511 = vld [vmem:[#allocation3 + $0x28] sm:$0xff]
        %v512 = vld [vmem:[#allocation3 + $0x30] sm:$0xff]
        %v513 = vld [vmem:[#allocation3 + $0x38] sm:$0xff]
        %v514 = vadd.f32 %v506, %v476
        %v515 = vadd.f32 %v507, %v479
        %v516 = vadd.f32 %v508, %v484
        %v517 = vadd.f32 %v509, %v487
        %v518 = vadd.f32 %v510, %v492
        %v519 = vadd.f32 %v511, %v495
        %v520 = vadd.f32 %v512, %v500
        %v521 = vadd.f32 %v513, %v503
        %v522 = vmul.f32 %v514, 0.5
        %v523 = vmul.f32 %v515, 0.5
        %v524 = vmul.f32 %v516, 0.5
        %v525 = vmul.f32 %v517, 0.5
        %v526 = vmul.f32 %v518, 0.5
        %v527 = vmul.f32 %v519, 0.5
        %v528 = vmul.f32 %v520, 0.5
        %v529 = vmul.f32 %v521, 0.5
        %vm530 = vcmp.ge.f32.partialorder %v522, 1.0
        %vm531 = vcmp.ge.f32.partialorder %v523, 1.0
        %vm532 = vcmp.ge.f32.partialorder %v524, 1.0
        %vm533 = vcmp.ge.f32.partialorder %v525, 1.0
        %vm534 = vcmp.ge.f32.partialorder %v526, 1.0
        %vm535 = vcmp.ge.f32.partialorder %v527, 1.0
        %vm536 = vcmp.ge.f32.partialorder %v528, 1.0
        %vm537 = vcmp.ge.f32.partialorder %v529, 1.0
        %v538 = vsel %vm530, 1, 0
        %v539 = vsel %vm531, 1, 0
        %v540 = vsel %vm532, 1, 0
        %v541 = vsel %vm533, 1, 0
        %v542 = vsel %vm534, 1, 0
        %v543 = vsel %vm535, 1, 0
        %v544 = vsel %vm536, 1, 0
        %v545 = vsel %vm537, 1, 0
        %v546 = vcvt.s32.f32 %v538
        %v547 = vcvt.s32.f32 %v539
        %v548 = vcvt.s32.f32 %v540
        %v549 = vcvt.s32.f32 %v541
        %v550 = vcvt.s32.f32 %v542
        %v551 = vcvt.s32.f32 %v543
        %v552 = vcvt.s32.f32 %v544
        %v553 = vcvt.s32.f32 %v545
        %v554 = vpack.c.bf16 %v547, %v546
        %v555 = vpack.c.bf16 %v549, %v548
        %v556 = vpack.c.bf16 %v551, %v550
        %v557 = vpack.c.bf16 %v553, %v552
        %v558 = vsel %vm530, 0.0, %v522
        %v559 = vsel %vm531, 0.0, %v523
        %v560 = vsel %vm532, 0.0, %v524
        %v561 = vsel %vm533, 0.0, %v525
        %v562 = vsel %vm534, 0.0, %v526
        %v563 = vsel %vm535, 0.0, %v527
        %v564 = vsel %vm536, 0.0, %v528
        %v565 = vsel %vm537, 0.0, %v529
        %566 = vst [vmem:[#allocation3] sm:$0xff] %v558
        %567 = vst [vmem:[#allocation3 + $0x8] sm:$0xff] %v559
        %568 = vst [vmem:[#allocation3 + $0x10] sm:$0xff] %v560
        %569 = vst [vmem:[#allocation3 + $0x18] sm:$0xff] %v561
        %570 = vst [vmem:[#allocation3 + $0x20] sm:$0xff] %v562
        %571 = vst [vmem:[#allocation3 + $0x28] sm:$0xff] %v563
        %572 = vst [vmem:[#allocation3 + $0x30] sm:$0xff] %v564
        %573 = vst [vmem:[#allocation3 + $0x38] sm:$0xff] %v565
        %v574 = vld [vmem:[%s3] sm:$0xf]
        %v575 = vld [vmem:[%s3 + $0x4] sm:$0xf]
        %v576 = vld [vmem:[%s3 + $0x8] sm:$0xf]
        %v577 = vld [vmem:[%s3 + $0xc] sm:$0xf]
        %v578 = vld [vmem:[%s4] sm:$0xff]
        %v579 = vld [vmem:[%s4 + $0x8] sm:$0xff]
        %v580 = vld [vmem:[%s4 + $0x10] sm:$0xff]
        %v581 = vld [vmem:[%s4 + $0x18] sm:$0xff]
        %583 = vset.pattern.permute.xlu0 0
        %584 = vperm.xlu0 %583, %v578
        %v585 = vpop.permute.xlu0 %584
        %588 = vset.pattern.permute.xlu0 0
        %589 = vperm.xlu0 %588, %v579
        %v590 = vpop.permute.xlu0 %589
        %593 = vset.pattern.permute.xlu0 0
        %594 = vperm.xlu0 %593, %v580
        %v595 = vpop.permute.xlu0 %594
        %598 = vset.pattern.permute.xlu0 0
        %599 = vperm.xlu0 %598, %v581
        %v600 = vpop.permute.xlu0 %599
        %v606 = vunpack.c.l.b16 %v574
        %v607 = vunpack.c.l.b16 %v575
        %v608 = vunpack.c.l.b16 %v576
        %v609 = vunpack.c.l.b16 %v577
        %v610 = vpack.c.b16 %v607, %v606
        %v611 = vpack.c.b16 %v609, %v608
        %vm612 = vcmask 523264
        %v614 = vsel %vm612, %v610, 0
        %v617 = vsel %vm612, %v611, 0
        %619 = vmatprep.subr.bf16.mxu0 0
        %620 = vmatpush1.bf16.msra.mxu0 0
        %621 = vmatprep.subr.bf16.mxu0 0
        %622 = vmatpush1.bf16.msra.mxu0 0
        %623 = vmatprep.subr.bf16.mxu0 0
        %624 = vmatpush1.bf16.msra.mxu0 0
        %625 = vmatprep.subr.bf16.mxu0 0
        %626 = vmatpush1.bf16.msra.mxu0 0
        %627 = vmatprep.subr.bf16.mxu0 0
        %628 = vmatpush1.bf16.msra.mxu0 %v557
        %629 = vmatprep.subr.bf16.mxu0 0
        %630 = vmatpush1.bf16.msra.mxu0 %v556
        %631 = vmatprep.subr.bf16.mxu0 0
        %632 = vmatpush1.bf16.msra.mxu0 %v555
        %633 = vmatprep.subr.bf16.mxu0 0
        %634 = vmatpush1.bf16.msra.mxu0 %v554
        %635 = vmatprep.subr.bf16.mxu0 0
        %636 = vmatpush2.bf16.msra.mxu0 0
        %637 = vmatprep.subr.bf16.mxu0 0
        %638 = vmatpush2.bf16.msra.mxu0 0
        %639 = vmatprep.subr.bf16.mxu0 0
        %640 = vmatpush2.bf16.msra.mxu0 0
        %641 = vmatprep.subr.bf16.mxu0 0
        %642 = vmatpush2.bf16.msra.mxu0 0
        %643 = vmatprep.subr.bf16.mxu0 0
        %644 = vmatpush2.bf16.msra.mxu0 0
        %645 = vmatprep.subr.bf16.mxu0 0
        %646 = vmatpush2.bf16.msra.mxu0 0
        %647 = vmatprep.subr.bf16.mxu0 0
        %648 = vmatpush2.bf16.msra.mxu0 0
        %649 = vmatprep.subr.bf16.mxu0 0
        %650 = vmatpush2.bf16.msra.mxu0 0
        %651 = vmatprep.mubr.bf16.mxu0 0
        %652 = vmatmul.mubr.bf16.gmra.mxu0 %v614
        %v653 = vpop.f32.mrf.mxu0
        %v654 = vadd.f32 %v585, %v653
        %v655 = vpop.f32.mrf.mxu0
        %v656 = vpop.f32.mrf.mxu0
        %v657 = vadd.f32 %v590, %v656
        %v658 = vpop.f32.mrf.mxu0
        %659 = vmatprep.mubr.bf16.mxu0 0
        %660 = vmatmul.mubr.bf16.gmra.mxu0 %v617
        %v661 = vpop.f32.mrf.mxu0
        %v662 = vadd.f32 %v595, %v661
        %v663 = vpop.f32.mrf.mxu0
        %v664 = vpop.f32.mrf.mxu0
        %v665 = vadd.f32 %v600, %v664
        %v666 = vpop.f32.mrf.mxu0
        %667 = vdwg.mxu0
        %668 = vst [vmem:[%s296] sm:$0xff] %v654
        %669 = vst [vmem:[%s296 + $0x8] sm:$0xff] %v657
        %670 = vst [vmem:[%s296 + $0x10] sm:$0xff] %v662
        %671 = vst [vmem:[%s296 + $0x18] sm:$0xff] %v665
        %s672 = sand.u32 %s161, 1
        %s673 = sand.u32 %s161, 1
        %s674 = smul.addr %s673, 32
        %s675 = scalar_lea.vmem [#allocation5], %s674
        // Predicated region
        $region83: #{ms_mlp_forward.1} parent=73 // pred_check
          %p676 = pneg %p171
        $region84: #{ms_mlp_forward.1} parent=73 // pred_check_branch
          %678 = sbr.rel (%p676) target = $region86
        $region85: #{ms_mlp_forward.1} parent=73 // pred_region
          %s679 = smul.addr %s21, 8
          %s680 = sadd.s32 %s22, %s679
          %s681 = smul.addr %s23, 16
          %s682 = sadd.s32 %s680, %s681
          %s683 = smul.addr %s682, 8
          %s684 = scalar_lea.vmem %s5, %s683
          // Predicated region
          $region87: #{ms_mlp_forward.1} parent=85 // pred_check
            _
          $region88: #{ms_mlp_forward.1} parent=85 // pred_check_branch
            %686 = sbr.rel (0) target = $region90
          $region89: #{ms_mlp_forward.1} parent=85 // pred_region
            // Predicated region
            $region91: #{ms_mlp_forward.1} parent=89 // pred_check
              _
            $region92: #{ms_mlp_forward.1} parent=89 // pred_check_branch
              %688 = sbr.rel (0) target = $region94
            $region93: #{ms_mlp_forward.1} parent=89 // pred_region
              // Predicated region
              $region106: #{ms_mlp_forward.1} parent=93 // pred_check
                _
              $region107: #{ms_mlp_forward.1} parent=93 // pred_check_branch
                %710 = sbr.rel (0) target = $region109
              $region108: #{ms_mlp_forward.1} parent=93 // pred_region
                loop: start=0, step=1, limit=1
                $region110: #{ms_mlp_forward.1} parent=108 // loop_pre_header
                  _
                $region111: #{ms_mlp_forward.1} parent=108 // loop_header
                  %s712 = sphi 0, %s716
                  %p713 = scmp.ge.s32.totalorder %s712, 1
                  %s717 = sphi %s675, %s675
                  %s718 = sphi %s684, %s684
                $region112: #{ms_mlp_forward.1} parent=108 // loop_header_branch
                  %715 = sbr.rel (%p713) target = $region116
                $region113: #{ms_mlp_forward.1} parent=108 // loop_body
                  %v719 = vld [vmem:[%s717] sm:$0xff]
                  %720 = vst [vmem:[%s718] sm:$0xff] %v719
                  %v721 = vld [vmem:[%s717 + $0x8] sm:$0xff]
                  %722 = vst [vmem:[%s718 + $0x10] sm:$0xff] %v721
                  %v723 = vld [vmem:[%s717 + $0x10] sm:$0xff]
                  %724 = vst [vmem:[%s718 + $0x20] sm:$0xff] %v723
                  %v725 = vld [vmem:[%s717 + $0x18] sm:$0xff]
                  %726 = vst [vmem:[%s718 + $0x30] sm:$0xff] %v725
                $region114: #{ms_mlp_forward.1} parent=108 // loop_footer
                  %s716 = sadd.s32 1, %s712
                $region115: #{ms_mlp_forward.1} parent=108 // loop_footer_branch
                  %711 = sbr.rel target = $region111
                $region116: #{ms_mlp_forward.1} parent=108 // loop_exit
                  _
              $region109: #{ms_mlp_forward.1} parent=93 // pred_fallthru
                _
              // Predicated region
              $region117: #{ms_mlp_forward.1} parent=93 // pred_check
                _
              $region118: #{ms_mlp_forward.1} parent=93 // pred_check_branch
                %728 = sbr.rel target = $region120
              $region119: #{ms_mlp_forward.1} parent=93 // pred_region
                _
              $region120: #{ms_mlp_forward.1} parent=93 // pred_fallthru
                _
            $region94: #{ms_mlp_forward.1} parent=89 // pred_fallthru
              _
            // Predicated region
            $region95: #{ms_mlp_forward.1} parent=89 // pred_check
              _
            $region96: #{ms_mlp_forward.1} parent=89 // pred_check_branch
              %690 = sbr.rel target = $region98
            $region97: #{ms_mlp_forward.1} parent=89 // pred_region
              %s692 = ssub.s32 256, 1
              loop: start=0, step=1, limit=1
              $region99: #{ms_mlp_forward.1} parent=97 // loop_pre_header
                _
              $region100: #{ms_mlp_forward.1} parent=97 // loop_header
                %s694 = sphi 0, %s698
                %p695 = scmp.ge.s32.totalorder %s694, 1
                %s699 = sphi %s675, %s675
                %s700 = sphi %s684, %s684
              $region101: #{ms_mlp_forward.1} parent=97 // loop_header_branch
                %697 = sbr.rel (%p695) target = $region105
              $region102: #{ms_mlp_forward.1} parent=97 // loop_body
                %v701 = vld [vmem:[%s699] sm:%s692]
                %702 = vst [vmem:[%s700] sm:%s692] %v701
                %v703 = vld [vmem:[%s699 + $0x8] sm:%s692]
                %704 = vst [vmem:[%s700 + $0x10] sm:%s692] %v703
                %v705 = vld [vmem:[%s699 + $0x10] sm:%s692]
                %706 = vst [vmem:[%s700 + $0x20] sm:%s692] %v705
                %v707 = vld [vmem:[%s699 + $0x18] sm:%s692]
                %708 = vst [vmem:[%s700 + $0x30] sm:%s692] %v707
              $region103: #{ms_mlp_forward.1} parent=97 // loop_footer
                %s698 = sadd.s32 1, %s694
              $region104: #{ms_mlp_forward.1} parent=97 // loop_footer_branch
                %693 = sbr.rel target = $region100
              $region105: #{ms_mlp_forward.1} parent=97 // loop_exit
                _
            $region98: #{ms_mlp_forward.1} parent=89 // pred_fallthru
              _
          $region90: #{ms_mlp_forward.1} parent=85 // pred_fallthru
            _
          %729 = vnop
        $region86: #{ms_mlp_forward.1} parent=73 // pred_fallthru
          _
      $region74: #{ms_mlp_forward.1} parent=5 // pred_fallthru
        _
      %p730 = scmp.le.s32.totalorder 2, %s11
      // Predicated region
      $region121: #{ms_mlp_forward.1} parent=5 // pred_check
        %p731 = pneg %p730
      $region122: #{ms_mlp_forward.1} parent=5 // pred_check_branch
        %733 = sbr.rel (%p731) target = $region124
      $region123: #{ms_mlp_forward.1} parent=5 // pred_region
        %s734 = ssub.s32 %s11, 2
        // Predicated region
        $region125: #{ms_mlp_forward.1} parent=123 // pred_check
          %p735 = pneg %p177
        $region126: #{ms_mlp_forward.1} parent=123 // pred_check_branch
          %737 = sbr.rel (%p735) target = $region128
        $region127: #{ms_mlp_forward.1} parent=123 // pred_region
          %s738 = sand.u32 %s162, 1
          %s739 = sand.u32 %s162, 1
          %s740 = smul.addr %s739, 32
          %s741 = scalar_lea.vmem [#allocation5], %s740
        $region128: #{ms_mlp_forward.1} parent=123 // pred_fallthru
          _
      $region124: #{ms_mlp_forward.1} parent=5 // pred_fallthru
        _
    $region6: #{ms_mlp_forward.1} parent=1 // loop_footer
      %s15 = sadd.s32 1, %s11
    $region7: #{ms_mlp_forward.1} parent=1 // loop_footer_branch
      %10 = sbr.rel target = $region3
    $region8: #{ms_mlp_forward.1} parent=1 // loop_exit
      _

</llo_original>
